<compile_context>
chip_gen: v7x
topology: tpu7x:2x2x1
jax: 0.10.0
libtpu: 0.0.40
codegen_flags: <defaults>
</compile_context>

<pallas_src>
import functools
import math

import jax
import jax.numpy as jnp
from jax import lax
from jax.experimental import pallas as pl
from jax.experimental.pallas import tpu as pltpu


# --------------------------------------------------------------------------- #
# Kernel
# --------------------------------------------------------------------------- #
def _bert_self_attention_kernel(x_ref, w_ref, b_ref, mask_ref, o_ref,
                                *, heads_per_step, head_size):
    """One (batch row, head group) tile per grid step.

    x_ref    : (1, S, H)        bf16  hidden states for batch b
    w_ref    : (1, H, 3*G*hd)   bf16  fused [Wq|Wk|Wv] for head group g
                                      (1/sqrt(hd) pre-folded into the Wq part)
    b_ref    : (1, 1, 3*G*hd)   f32   fused [bq|bk|bv] (bq pre-scaled)
    mask_ref : (1, 1, S)        f32   additive key mask for batch b
    o_ref    : (1, S, G*hd)           context output for head group g
    """
    ghd = heads_per_step * head_size

    x = x_ref[0]                                    # (S, H)       bf16
    w = w_ref[0]                                    # (H, 3*G*hd)  bf16

    # Fused per-group QKV projection: one MXU pass, f32 accumulation + bias.
    qkv = jnp.dot(x, w, preferred_element_type=jnp.float32) + b_ref[0]

    q = qkv[:, :ghd].astype(jnp.bfloat16)           # (S, G*hd)  scale pre-folded
    k = qkv[:, ghd:2 * ghd].astype(jnp.bfloat16)    # (S, G*hd)
    v = qkv[:, 2 * ghd:].astype(jnp.bfloat16)       # (S, G*hd)
    mask_row = mask_ref[0]                          # (1, S) broadcasts over queries

    ctx_parts = []
    for h in range(heads_per_step):                 # tiny static loop (G heads)
        sl = slice(h * head_size, (h + 1) * head_size)

        # scores = q_h @ k_h^T  (contract on head dim; no explicit transpose).
        scores = lax.dot_general(
            q[:, sl], k[:, sl], (((1,), (1,)), ((), ())),
            preferred_element_type=jnp.float32)     # (S, S) f32
        scores = scores + mask_row

        # Numerically stable softmax in f32; 1/l is folded into the (S, hd)
        # context below instead of dividing the (S, S) probabilities.
        m = jnp.max(scores, axis=-1, keepdims=True)
        p = jnp.exp(scores - m)
        l = jnp.sum(p, axis=-1, keepdims=True)

        # TODO(synk): attention-probs dropout is identity in eval mode; the
        # torch training-mode dropout RNG is not reproduced here.
        ctx = jnp.dot(p.astype(jnp.bfloat16), v[:, sl],
                      preferred_element_type=jnp.float32)   # (S, hd) f32
        ctx_parts.append(ctx * pl.reciprocal(l, approx=True))

    ctx_all = (ctx_parts[0] if heads_per_step == 1
               else jnp.concatenate(ctx_parts, axis=-1))     # (S, G*hd)
    o_ref[0] = ctx_all.astype(o_ref.dtype)          # lane-dense 128-aligned store


# --------------------------------------------------------------------------- #
# Builder helpers
# --------------------------------------------------------------------------- #
def _choose_heads_per_step(num_heads, head_size):
    """Smallest head-group size G with G*head_size a multiple of 128 lanes."""
    if head_size % 128 == 0:
        return 1
    g = 128 // math.gcd(head_size, 128)
    if g <= num_heads and num_heads % g == 0:
        return g
    return num_heads  # fall back to all heads per step (G*hd == H, full dim)


def _vmem_limit_bytes(S, H, heads_per_step, head_size, out_itemsize):
    """Per-grid-step working-set estimate, clamped to a generation-aware cap."""
    ghd = heads_per_step * head_size
    est = 0
    est += 2 * S * H * 2                 # x block, double-buffered, bf16
    est += 2 * H * 3 * ghd * 2           # per-group weights, double-buffered, bf16
    est += 2 * 3 * ghd * 4               # fused bias, f32
    est += 2 * S * 4                     # mask row, f32
    est += 2 * S * ghd * out_itemsize    # output block, double-buffered
    est += S * 3 * ghd * 4               # qkv f32 temporary
    est += S * 3 * ghd * 2               # q/k/v bf16 views
    est += 3 * S * S * 4                 # live per-head f32 score temporaries
    est += heads_per_step * S * head_size * 4   # context parts
    est = int(est * 1.5)                 # headroom for Mosaic-internal scratch

    try:
        info = pltpu.get_tpu_info()
        capacity = int(getattr(info, "vmem_capacity_bytes", 128 * 1024 * 1024))
    except Exception:
        capacity = 128 * 1024 * 1024
    ceiling = (capacity * 4) // 5        # ~80%: headroom below physical VMEM
    floor = min(32 * 1024 * 1024, ceiling)
    return max(floor, min(est, ceiling))


@functools.lru_cache(maxsize=None)
def _build_attention_fn(B, S, H, num_heads, heads_per_step, head_size,
                        out_dtype_name):
    out_dtype = jnp.dtype(out_dtype_name)
    ghd = heads_per_step * head_size
    num_groups = num_heads // heads_per_step

    kernel = functools.partial(
        _bert_self_attention_kernel,
        heads_per_step=heads_per_step, head_size=head_size)

    in_specs = [
        pl.BlockSpec((1, S, H), lambda b, g: (b, 0, 0)),         # x (bf16)
        pl.BlockSpec((1, H, 3 * ghd), lambda b, g: (g, 0, 0)),   # Wqkv group (bf16)
        pl.BlockSpec((1, 1, 3 * ghd), lambda b, g: (g, 0, 0)),   # bqkv group (f32)
        pl.BlockSpec((1, 1, S), lambda b, g: (b, 0, 0)),         # mask (f32)
    ]
    out_specs = pl.BlockSpec((1, S, ghd), lambda b, g: (b, 0, g))

    flops = 2 * B * S * H * 3 * H + 4 * B * S * S * H           # proj + scores + ctx
    transcendentals = B * num_heads * S * (S + 1)               # exp + reciprocal
    bytes_accessed = (B * S * H * 2            # x
                      + B * H * 3 * H * 2      # weights (re-streamed per batch row)
                      + B * 3 * H * 4          # bias
                      + B * S * 4              # mask
                      + B * S * H * out_dtype.itemsize)

    return pl.pallas_call(
        kernel,
        out_shape=jax.ShapeDtypeStruct((B, S, H), out_dtype),
        grid_spec=pltpu.PrefetchScalarGridSpec(
            num_scalar_prefetch=0,
            grid=(B, num_groups),                 # head-group axis innermost
            in_specs=in_specs,
            out_specs=out_specs,
        ),
        compiler_params=pltpu.CompilerParams(
            dimension_semantics=("parallel", "parallel"),
            vmem_limit_bytes=_vmem_limit_bytes(
                S, H, heads_per_step, head_size, out_dtype.itemsize),
        ),
        cost_estimate=pl.CostEstimate(
            flops=flops,
            transcendentals=transcendentals,
            bytes_accessed=bytes_accessed),
    )


# --------------------------------------------------------------------------- #
# Public API
# --------------------------------------------------------------------------- #
def fuse_bert_attention_weights(wq, wk, wv, bq, bk, bv, num_heads):
    """Fuse + head-block + scale-fold the projection params.

    Call ONCE per set of weights and cache the result (per-call fusion is pure
    HBM-traffic overhead). w*: [H, H] in (in, out) order; b*: [H].
    Returns (wqkv, bqkv, meta) with wqkv: (NG, H, 3*G*hd) bf16 and
    bqkv: (NG, 1, 3*G*hd) f32; the 1/sqrt(head_size) scale is folded into Wq/bq.
    """
    H = wq.shape[0]
    if H % num_heads != 0:
        raise ValueError(f"hidden size {H} not divisible by num_heads {num_heads}")
    head_size = H // num_heads
    heads_per_step = _choose_heads_per_step(num_heads, head_size)
    num_groups = num_heads // heads_per_step
    ghd = heads_per_step * head_size
    scale = float(head_size) ** -0.5

    def blk_w(w):   # (H, H) -> (NG, H, G*hd): group g holds heads [g*G,(g+1)*G)
        return w.reshape(H, num_groups, ghd).transpose(1, 0, 2)

    def blk_b(b):   # (H,) -> (NG, 1, G*hd)
        return b.reshape(num_groups, 1, ghd)

    wqkv = jnp.concatenate(
        [blk_w(wq * scale), blk_w(wk), blk_w(wv)], axis=-1).astype(jnp.bfloat16)
    bqkv = jnp.concatenate(
        [blk_b(bq * scale), blk_b(bk), blk_b(bv)], axis=-1).astype(jnp.float32)
    return wqkv, bqkv, (num_heads, head_size, heads_per_step)


def _normalize_mask(attention_mask, B, S):
    """Normalize an additive key mask to [B, 1, S] f32 (no [B,S,S] expansion)."""
    if attention_mask is None:
        return jnp.zeros((B, 1, S), dtype=jnp.float32)
    m = attention_mask
    if m.ndim == 4:                      # HF canonical [B, 1, 1, S]
        if m.shape[1] != 1 or m.shape[2] != 1:
            raise ValueError(f"unsupported 4D mask shape {m.shape}; expected [B,1,1,S]")
        m = m[:, 0, 0, :]
    elif m.ndim == 3:                    # [B, 1, S]
        if m.shape[1] != 1:
            raise ValueError(f"per-query masks not supported; expected [B,1,S], got {m.shape}")
        m = m[:, 0, :]
    elif m.ndim != 2:                    # [B, S]
        raise ValueError(f"unsupported mask rank {m.ndim}")
    m = jnp.broadcast_to(m, (B, S))
    return m.reshape(B, 1, S).astype(jnp.float32)


def bert_self_attention(hidden_states, fused_params, attention_mask=None,
                        out_dtype=None):
    """BertSelfAttention forward with pre-fused weights (preferred path).

    hidden_states: [B, S, H]; fused_params: output of fuse_bert_attention_weights;
    attention_mask: additive key mask ([B,1,S], [B,S] or HF [B,1,1,S]) or None.
    out_dtype: output dtype (e.g. jnp.bfloat16 to halve writeback bytes);
    defaults to hidden_states.dtype.
    """
    wqkv, bqkv, (num_heads, head_size, heads_per_step) = fused_params
    B, S, H = hidden_states.shape
    if H != num_heads * head_size:
        raise ValueError(f"hidden size {H} does not match fused params "
                         f"({num_heads} x {head_size})")

    x = hidden_states.astype(jnp.bfloat16)
    mask = _normalize_mask(attention_mask, B, S)
    out_dtype = hidden_states.dtype if out_dtype is None else out_dtype

    fn = _build_attention_fn(B, S, H, num_heads, heads_per_step, head_size,
                             jnp.dtype(out_dtype).name)
    return fn(x, wqkv, bqkv, mask)


def bert_self_attention_unfused(hidden_states, wq, wk, wv, bq, bk, bv,
                                attention_mask, num_heads, out_dtype=None):
    """Convenience wrapper fusing weights per call (slower; prefer fusing once)."""
    params = fuse_bert_attention_weights(wq, wk, wv, bq, bk, bv, num_heads)
    return bert_self_attention(hidden_states, params, attention_mask, out_dtype)


# --------------------------------------------------------------------------- #
# Pure-JAX reference (mirrors the PyTorch forward in eval mode)
# --------------------------------------------------------------------------- #
def _reference(hidden_states, wq, wk, wv, bq, bk, bv, attention_mask, num_heads):
    B, S, H = hidden_states.shape
    hd = H // num_heads

    def split(x):  # (B,S,H) -> (B,nh,S,hd)
        return x.reshape(B, S, num_heads, hd).transpose(0, 2, 1, 3)

    q = split(hidden_states @ wq + bq)
    k = split(hidden_states @ wk + bk)
    v = split(hidden_states @ wv + bv)
    scores = jnp.einsum("bhqd,bhkd->bhqk", q, k) / jnp.sqrt(jnp.float32(hd))
    if attention_mask is not None:
        scores = scores + attention_mask.reshape(B, 1, 1, S)
    probs = jax.nn.softmax(scores, axis=-1)
    ctx = jnp.einsum("bhqk,bhkd->bhqd", probs, v)
    return ctx.transpose(0, 2, 1, 3).reshape(B, S, H)


if __name__ == "__main__":
    # Small BERT-like config: batch=2, seq=8, hidden=32, heads=4, head_size=8.
    B, S, H, NH = 2, 8, 32, 4

    key = jax.random.PRNGKey(0)
    ks = jax.random.split(key, 8)
    hidden = jax.random.normal(ks[0], (B, S, H), dtype=jnp.float32)
    # nn.Linear weights are (out, in); the kernel takes W.T = (in, out).
    wq = (0.02 * jax.random.normal(ks[1], (H, H), dtype=jnp.float32)).T
    wk = (0.02 * jax.random.normal(ks[2], (H, H), dtype=jnp.float32)).T
    wv = (0.02 * jax.random.normal(ks[3], (H, H), dtype=jnp.float32)).T
    bq = 0.02 * jax.random.normal(ks[4], (H,), dtype=jnp.float32)
    bk = 0.02 * jax.random.normal(ks[5], (H,), dtype=jnp.float32)
    bv = 0.02 * jax.random.normal(ks[6], (H,), dtype=jnp.float32)

    # Additive key mask (HF convention: 0 keep, -10000 masked), shape [B, 1, S];
    # batch 1 has its last two key positions masked out.
    mask = jnp.zeros((B, 1, S), dtype=jnp.float32)
    mask = mask.at[1, 0, S - 2:].set(-10000.0)

    # Fuse / repack the projection weights ONCE (cacheable across calls).
    fused = fuse_bert_attention_weights(wq, wk, wv, bq, bk, bv, NH)

    out = bert_self_attention(hidden, fused, mask)
    out = jax.block_until_ready(out)

    ref = _reference(hidden, wq, wk, wv, bq, bk, bv, mask, NH)
    assert out.shape == (B, S, H)
    # bf16 MXU operands (f32 accumulation) + approx reciprocal -> relaxed tol.
    assert jnp.allclose(out, ref, atol=2e-2, rtol=2e-2), "mismatch vs reference"

    print("KERNEL_OK")
</pallas_src>

<mosaic_0001>
module attributes {stable_mosaic.version = 11 : i64} {
  func.func @_bert_self_attention_kernel(%arg0: i32, %arg1: i32, %arg2: memref<1x8x32xbf16, #tpu.memory_space<vmem>>, %arg3: memref<1x32x96xbf16, #tpu.memory_space<vmem>>, %arg4: memref<1x1x96xf32, #tpu.memory_space<vmem>>, %arg5: memref<1x1x8xf32, #tpu.memory_space<vmem>>, %arg6: memref<1x8x32xf32, #tpu.memory_space<vmem>>) attributes {dimension_semantics = [#tpu.dimension_semantics<parallel>, #tpu.dimension_semantics<parallel>], iteration_bounds = array<i64: 2, 1>, scalar_prefetch = 0 : i64, scratch_operands = 0 : i64, tpu.core_type = #tpu.core_type<tc>, window_params = [{transform_indices = @transform_0, window_bounds = array<i64: 1, 8, 32>}, {transform_indices = @transform_1, window_bounds = array<i64: 1, 32, 96>}, {transform_indices = @transform_2, window_bounds = array<i64: 1, 1, 96>}, {transform_indices = @transform_3, window_bounds = array<i64: 1, 1, 8>}, {transform_indices = @transform_4, window_bounds = array<i64: 1, 8, 32>}]} {
    %c0 = arith.constant 0 : index
    %c0_0 = arith.constant 0 : index
    %c0_1 = arith.constant 0 : index
    %0 = vector.load %arg2[%c0, %c0_0, %c0_1] : memref<1x8x32xbf16, #tpu.memory_space<vmem>>, vector<1x8x32xbf16>
    %1 = vector.shape_cast %0 : vector<1x8x32xbf16> to vector<8x32xbf16>
    %c0_2 = arith.constant 0 : index
    %c0_3 = arith.constant 0 : index
    %c0_4 = arith.constant 0 : index
    %2 = vector.load %arg3[%c0_2, %c0_3, %c0_4] : memref<1x32x96xbf16, #tpu.memory_space<vmem>>, vector<1x32x96xbf16>
    %3 = vector.shape_cast %2 : vector<1x32x96xbf16> to vector<32x96xbf16>
    %cst = arith.constant dense<0.000000e+00> : vector<8x96xf32>
    %4 = tpu.matmul %1, %3, %cst {dimension_numbers = #tpu.dot_dimension_numbers<[1], [0], [0], [1], [0, 0, 1, 1], [], []>} : vector<8x32xbf16>, vector<32x96xbf16>, vector<8x96xf32> -> vector<8x96xf32>
    %c0_5 = arith.constant 0 : index
    %c0_6 = arith.constant 0 : index
    %c0_7 = arith.constant 0 : index
    %5 = vector.load %arg4[%c0_5, %c0_6, %c0_7] : memref<1x1x96xf32, #tpu.memory_space<vmem>>, vector<1x1x96xf32>
    %6 = vector.shape_cast %5 : vector<1x1x96xf32> to vector<1x96xf32>
    %7 = vector.broadcast %6 : vector<1x96xf32> to vector<8x96xf32>
    %8 = arith.addf %4, %7 : vector<8x96xf32>
    %9 = vector.extract_strided_slice %8 {offsets = [0, 0], sizes = [8, 32], strides = [1, 1]} : vector<8x96xf32> to vector<8x32xf32>
    %10 = arith.truncf %9 : vector<8x32xf32> to vector<8x32xbf16>
    %11 = vector.extract_strided_slice %8 {offsets = [0, 32], sizes = [8, 32], strides = [1, 1]} : vector<8x96xf32> to vector<8x32xf32>
    %12 = arith.truncf %11 : vector<8x32xf32> to vector<8x32xbf16>
    %13 = vector.extract_strided_slice %8 {offsets = [0, 64], sizes = [8, 32], strides = [1, 1]} : vector<8x96xf32> to vector<8x32xf32>
    %14 = arith.truncf %13 : vector<8x32xf32> to vector<8x32xbf16>
    %c0_8 = arith.constant 0 : index
    %c0_9 = arith.constant 0 : index
    %c0_10 = arith.constant 0 : index
    %15 = vector.load %arg5[%c0_8, %c0_9, %c0_10] : memref<1x1x8xf32, #tpu.memory_space<vmem>>, vector<1x1x8xf32>
    %16 = vector.shape_cast %15 : vector<1x1x8xf32> to vector<1x8xf32>
    %17 = vector.extract_strided_slice %10 {offsets = [0, 0], sizes = [8, 8], strides = [1, 1]} : vector<8x32xbf16> to vector<8x8xbf16>
    %18 = vector.extract_strided_slice %12 {offsets = [0, 0], sizes = [8, 8], strides = [1, 1]} : vector<8x32xbf16> to vector<8x8xbf16>
    %cst_11 = arith.constant dense<0.000000e+00> : vector<8x8xf32>
    %19 = tpu.matmul %17, %18, %cst_11 {dimension_numbers = #tpu.dot_dimension_numbers<[1], [1], [0], [0], [0, 0, 1, 0], [], []>} : vector<8x8xbf16>, vector<8x8xbf16>, vector<8x8xf32> -> vector<8x8xf32>
    %20 = vector.broadcast %16 : vector<1x8xf32> to vector<8x8xf32>
    %21 = arith.addf %19, %20 : vector<8x8xf32>
    %cst_12 = arith.constant dense<0xFF800000> : vector<8xf32>
    %22 = vector.multi_reduction <maximumf>, %21, %cst_12 [1] : vector<8x8xf32> to vector<8xf32>
    %23 = vector.shape_cast %22 : vector<8xf32> to vector<8x1xf32>
    %24 = vector.broadcast %23 : vector<8x1xf32> to vector<8x8xf32>
    %25 = arith.subf %21, %24 : vector<8x8xf32>
    %26 = math.exp %25 : vector<8x8xf32>
    %cst_13 = arith.constant dense<0.000000e+00> : vector<8xf32>
    %27 = vector.multi_reduction <add>, %26, %cst_13 [1] : vector<8x8xf32> to vector<8xf32>
    %28 = vector.shape_cast %27 : vector<8xf32> to vector<8x1xf32>
    %29 = arith.truncf %26 : vector<8x8xf32> to vector<8x8xbf16>
    %30 = vector.extract_strided_slice %14 {offsets = [0, 0], sizes = [8, 8], strides = [1, 1]} : vector<8x32xbf16> to vector<8x8xbf16>
    %cst_14 = arith.constant dense<0.000000e+00> : vector<8x8xf32>
    %31 = tpu.matmul %29, %30, %cst_14 {dimension_numbers = #tpu.dot_dimension_numbers<[1], [0], [0], [1], [0, 0, 1, 1], [], []>} : vector<8x8xbf16>, vector<8x8xbf16>, vector<8x8xf32> -> vector<8x8xf32>
    %32 = tpu.reciprocal %28 {approx = true} : vector<8x1xf32> -> vector<8x1xf32>
    %33 = vector.broadcast %32 : vector<8x1xf32> to vector<8x8xf32>
    %34 = arith.mulf %31, %33 : vector<8x8xf32>
    %35 = vector.extract_strided_slice %10 {offsets = [0, 8], sizes = [8, 8], strides = [1, 1]} : vector<8x32xbf16> to vector<8x8xbf16>
    %36 = vector.extract_strided_slice %12 {offsets = [0, 8], sizes = [8, 8], strides = [1, 1]} : vector<8x32xbf16> to vector<8x8xbf16>
    %cst_15 = arith.constant dense<0.000000e+00> : vector<8x8xf32>
    %37 = tpu.matmul %35, %36, %cst_15 {dimension_numbers = #tpu.dot_dimension_numbers<[1], [1], [0], [0], [0, 0, 1, 0], [], []>} : vector<8x8xbf16>, vector<8x8xbf16>, vector<8x8xf32> -> vector<8x8xf32>
    %38 = vector.broadcast %16 : vector<1x8xf32> to vector<8x8xf32>
    %39 = arith.addf %37, %38 : vector<8x8xf32>
    %cst_16 = arith.constant dense<0xFF800000> : vector<8xf32>
    %40 = vector.multi_reduction <maximumf>, %39, %cst_16 [1] : vector<8x8xf32> to vector<8xf32>
    %41 = vector.shape_cast %40 : vector<8xf32> to vector<8x1xf32>
    %42 = vector.broadcast %41 : vector<8x1xf32> to vector<8x8xf32>
    %43 = arith.subf %39, %42 : vector<8x8xf32>
    %44 = math.exp %43 : vector<8x8xf32>
    %cst_17 = arith.constant dense<0.000000e+00> : vector<8xf32>
    %45 = vector.multi_reduction <add>, %44, %cst_17 [1] : vector<8x8xf32> to vector<8xf32>
    %46 = vector.shape_cast %45 : vector<8xf32> to vector<8x1xf32>
    %47 = arith.truncf %44 : vector<8x8xf32> to vector<8x8xbf16>
    %48 = vector.extract_strided_slice %14 {offsets = [0, 8], sizes = [8, 8], strides = [1, 1]} : vector<8x32xbf16> to vector<8x8xbf16>
    %cst_18 = arith.constant dense<0.000000e+00> : vector<8x8xf32>
    %49 = tpu.matmul %47, %48, %cst_18 {dimension_numbers = #tpu.dot_dimension_numbers<[1], [0], [0], [1], [0, 0, 1, 1], [], []>} : vector<8x8xbf16>, vector<8x8xbf16>, vector<8x8xf32> -> vector<8x8xf32>
    %50 = tpu.reciprocal %46 {approx = true} : vector<8x1xf32> -> vector<8x1xf32>
    %51 = vector.broadcast %50 : vector<8x1xf32> to vector<8x8xf32>
    %52 = arith.mulf %49, %51 : vector<8x8xf32>
    %53 = vector.extract_strided_slice %10 {offsets = [0, 16], sizes = [8, 8], strides = [1, 1]} : vector<8x32xbf16> to vector<8x8xbf16>
    %54 = vector.extract_strided_slice %12 {offsets = [0, 16], sizes = [8, 8], strides = [1, 1]} : vector<8x32xbf16> to vector<8x8xbf16>
    %cst_19 = arith.constant dense<0.000000e+00> : vector<8x8xf32>
    %55 = tpu.matmul %53, %54, %cst_19 {dimension_numbers = #tpu.dot_dimension_numbers<[1], [1], [0], [0], [0, 0, 1, 0], [], []>} : vector<8x8xbf16>, vector<8x8xbf16>, vector<8x8xf32> -> vector<8x8xf32>
    %56 = vector.broadcast %16 : vector<1x8xf32> to vector<8x8xf32>
    %57 = arith.addf %55, %56 : vector<8x8xf32>
    %cst_20 = arith.constant dense<0xFF800000> : vector<8xf32>
    %58 = vector.multi_reduction <maximumf>, %57, %cst_20 [1] : vector<8x8xf32> to vector<8xf32>
    %59 = vector.shape_cast %58 : vector<8xf32> to vector<8x1xf32>
    %60 = vector.broadcast %59 : vector<8x1xf32> to vector<8x8xf32>
    %61 = arith.subf %57, %60 : vector<8x8xf32>
    %62 = math.exp %61 : vector<8x8xf32>
    %cst_21 = arith.constant dense<0.000000e+00> : vector<8xf32>
    %63 = vector.multi_reduction <add>, %62, %cst_21 [1] : vector<8x8xf32> to vector<8xf32>
    %64 = vector.shape_cast %63 : vector<8xf32> to vector<8x1xf32>
    %65 = arith.truncf %62 : vector<8x8xf32> to vector<8x8xbf16>
    %66 = vector.extract_strided_slice %14 {offsets = [0, 16], sizes = [8, 8], strides = [1, 1]} : vector<8x32xbf16> to vector<8x8xbf16>
    %cst_22 = arith.constant dense<0.000000e+00> : vector<8x8xf32>
    %67 = tpu.matmul %65, %66, %cst_22 {dimension_numbers = #tpu.dot_dimension_numbers<[1], [0], [0], [1], [0, 0, 1, 1], [], []>} : vector<8x8xbf16>, vector<8x8xbf16>, vector<8x8xf32> -> vector<8x8xf32>
    %68 = tpu.reciprocal %64 {approx = true} : vector<8x1xf32> -> vector<8x1xf32>
    %69 = vector.broadcast %68 : vector<8x1xf32> to vector<8x8xf32>
    %70 = arith.mulf %67, %69 : vector<8x8xf32>
    %71 = vector.extract_strided_slice %10 {offsets = [0, 24], sizes = [8, 8], strides = [1, 1]} : vector<8x32xbf16> to vector<8x8xbf16>
    %72 = vector.extract_strided_slice %12 {offsets = [0, 24], sizes = [8, 8], strides = [1, 1]} : vector<8x32xbf16> to vector<8x8xbf16>
    %cst_23 = arith.constant dense<0.000000e+00> : vector<8x8xf32>
    %73 = tpu.matmul %71, %72, %cst_23 {dimension_numbers = #tpu.dot_dimension_numbers<[1], [1], [0], [0], [0, 0, 1, 0], [], []>} : vector<8x8xbf16>, vector<8x8xbf16>, vector<8x8xf32> -> vector<8x8xf32>
    %74 = vector.broadcast %16 : vector<1x8xf32> to vector<8x8xf32>
    %75 = arith.addf %73, %74 : vector<8x8xf32>
    %cst_24 = arith.constant dense<0xFF800000> : vector<8xf32>
    %76 = vector.multi_reduction <maximumf>, %75, %cst_24 [1] : vector<8x8xf32> to vector<8xf32>
    %77 = vector.shape_cast %76 : vector<8xf32> to vector<8x1xf32>
    %78 = vector.broadcast %77 : vector<8x1xf32> to vector<8x8xf32>
    %79 = arith.subf %75, %78 : vector<8x8xf32>
    %80 = math.exp %79 : vector<8x8xf32>
    %cst_25 = arith.constant dense<0.000000e+00> : vector<8xf32>
    %81 = vector.multi_reduction <add>, %80, %cst_25 [1] : vector<8x8xf32> to vector<8xf32>
    %82 = vector.shape_cast %81 : vector<8xf32> to vector<8x1xf32>
    %83 = arith.truncf %80 : vector<8x8xf32> to vector<8x8xbf16>
    %84 = vector.extract_strided_slice %14 {offsets = [0, 24], sizes = [8, 8], strides = [1, 1]} : vector<8x32xbf16> to vector<8x8xbf16>
    %cst_26 = arith.constant dense<0.000000e+00> : vector<8x8xf32>
    %85 = tpu.matmul %83, %84, %cst_26 {dimension_numbers = #tpu.dot_dimension_numbers<[1], [0], [0], [1], [0, 0, 1, 1], [], []>} : vector<8x8xbf16>, vector<8x8xbf16>, vector<8x8xf32> -> vector<8x8xf32>
    %86 = tpu.reciprocal %82 {approx = true} : vector<8x1xf32> -> vector<8x1xf32>
    %87 = vector.broadcast %86 : vector<8x1xf32> to vector<8x8xf32>
    %88 = arith.mulf %85, %87 : vector<8x8xf32>
    %89 = tpu.concatenate %34, %52, %70, %88 in 1 : vector<8x8xf32>, vector<8x8xf32>, vector<8x8xf32>, vector<8x8xf32> -> vector<8x32xf32>
    %c0_27 = arith.constant 0 : index
    %c0_28 = arith.constant 0 : index
    %c0_29 = arith.constant 0 : index
    %90 = vector.load %arg6[%c0_27, %c0_28, %c0_29] : memref<1x8x32xf32, #tpu.memory_space<vmem>>, vector<1x8x32xf32>
    %91 = vector.shape_cast %90 : vector<1x8x32xf32> to vector<8x32xf32>
    %92 = vector.shape_cast %89 : vector<8x32xf32> to vector<1x8x32xf32>
    tpu.vector_store %arg6[%c0_27, %c0_28, %c0_29], %92 {strides = array<i32>} : memref<1x8x32xf32, #tpu.memory_space<vmem>>, vector<1x8x32xf32>,
    return
  }
  func.func @transform_0(%arg0: i32, %arg1: i32) -> (i32, i32, i32) {
    %c0_i32 = arith.constant 0 : i32
    %c0_i32_0 = arith.constant 0 : i32
    %c0_i32_1 = arith.constant 0 : i32
    return %arg0, %c0_i32, %c0_i32_0 : i32, i32, i32
  }
  func.func @transform_1(%arg0: i32, %arg1: i32) -> (i32, i32, i32) {
    %c0_i32 = arith.constant 0 : i32
    %c0_i32_0 = arith.constant 0 : i32
    %c0_i32_1 = arith.constant 0 : i32
    return %arg1, %c0_i32, %c0_i32_0 : i32, i32, i32
  }
  func.func @transform_2(%arg0: i32, %arg1: i32) -> (i32, i32, i32) {
    %c0_i32 = arith.constant 0 : i32
    %c0_i32_0 = arith.constant 0 : i32
    %c0_i32_1 = arith.constant 0 : i32
    return %arg1, %c0_i32, %c0_i32_0 : i32, i32, i32
  }
  func.func @transform_3(%arg0: i32, %arg1: i32) -> (i32, i32, i32) {
    %c0_i32 = arith.constant 0 : i32
    %c0_i32_0 = arith.constant 0 : i32
    %c0_i32_1 = arith.constant 0 : i32
    return %arg0, %c0_i32, %c0_i32_0 : i32, i32, i32
  }
  func.func @transform_4(%arg0: i32, %arg1: i32) -> (i32, i32, i32) {
    %c0_i32 = arith.constant 0 : i32
    %c0_i32_0 = arith.constant 0 : i32
    return %arg0, %c0_i32, %arg1 : i32, i32, i32
  }
}

</mosaic_0001>

<llo_original>
// kernel: tpu_custom_call.1
$region0: #{tpu_custom_call.1}
  #allocation0 [shape = 'u32[]', space=smem, size = 0x4, offset = 0x4, fixed_abs, tag = 'smem constant byte address 0x4 - core index']
  #allocation1 [shape = 'u32[144,128]{1,0:T(1,128)}', space=vmem, size = 0x12000, scoped, tag = 'internal scratch']
  %s0 = inlined_call_operand.hbm [shape: bf16[2,8,32], index: 0, kind: input, shape index: {}]
  %s1 = inlined_call_operand.hbm [shape: bf16[1,32,96], index: 1, kind: input, shape index: {}]
  %s2 = inlined_call_operand.vmem [shape: f32[1,1,96], index: 2, kind: input, shape index: {}]
  %s3 = inlined_call_operand.vmem [shape: f32[2,1,8], index: 3, kind: input, shape index: {}]
  %s4 = inlined_call_operand.hbm [shape: f32[2,8,32], index: 4, kind: output, shape index: {}]
  %s5 = sld [smem:[#allocation0]]
  $region57: #{tpu_custom_call.1} parent=0
    _
  %s7 = ssub.s32 1, %s5
  %s8 = scalar_select 0, %s7, %s5
  $region1: #{tpu_custom_call.1} parent=0
    #allocation2 [shape = 'u8[4096]{0}', space=vmem, size = 0x1000, scoped, tag = 'input window, operand 0']
    #allocation3 [shape = 's32[2]{0}', space=sflag, size = 0x8, scoped, tag = 'scoped memory for tpu_custom_call.1']
    #allocation4 [shape = 's32[2]{0}', space=sflag, size = 0x8, scoped, tag = 'scoped memory for tpu_custom_call.1']
    #allocation5 [shape = 'u8[8192]{0}', space=vmem, size = 0x2000, scoped, tag = 'input window, operand 1, single buffered']
    #allocation6 [shape = 's32[1]{0}', space=sflag, size = 0x4, scoped, tag = 'scoped memory for tpu_custom_call.1']
    #allocation7 [shape = 'u8[8192]{0}', space=vmem, size = 0x2000, scoped, tag = 'output window, operand 0']
    %9 = vsyncpa [#allocation3], 0
    %s10 = scalar_lea.sflag [#allocation3], 1
    %11 = vsyncpa %s10, 0
    %12 = vsyncpa [#allocation6], 0
    %13 = vsyncpa [#allocation4], 0
    %s14 = scalar_lea.sflag [#allocation4], 1
    %15 = vsyncpa %s14, 0
    loop: start=0, step=1, limit=4
    $region2: #{tpu_custom_call.1} parent=1 // loop_pre_header
      _
    $region3: #{tpu_custom_call.1} parent=1 // loop_header
      %s17 = sphi 0, %s21
      %p18 = scmp.ge.s32.totalorder %s17, 4
      %s24 = sphi 0, %s36
      %s25 = sphi 0, %s32
      %s26 = sphi 0, %s24
      %s27 = sphi 0, %s25
      %s28 = sphi 0, %s26
      %s29 = sphi 0, %s27
      %s39 = sphi 0, %s41
      %s42 = sphi 0, %s39
      %s43 = sphi 0, %s42
      %s59 = sphi 0, %s43
      %s65 = sphi 0, %s67
      %s68 = sphi 0, %s65
      %s69 = sphi 0, %s68
      %s85 = sphi 0, %s69
      %s91 = sphi 0, %s93
      %s94 = sphi 0, %s91
      %s95 = sphi 0, %s94
      %s111 = sphi 0, %s95
      %s117 = sphi 0, %s119
      %s120 = sphi 0, %s117
      %s121 = sphi 0, %s120
      %s137 = sphi 0, %s121
      %s145 = sphi 0, %s147
      %s148 = sphi 0, %s145
      %s149 = sphi 0, %s148
      %s165 = sphi 0, %s149
    $region4: #{tpu_custom_call.1} parent=1 // loop_header_branch
      %20 = sbr.rel (%p18) target = $region8
    $region5: #{tpu_custom_call.1} parent=1 // loop_body
      %s22 = ssub.s32 %s17, 1
      %s23 = ssub.s32 %s17, 2
      %s30 = sadd.s32 1, %s25
      %p31 = scmp.ge.s32.totalorder %s30, 1
      %s32 = scalar_select %p31, 0, %s30
      %s33 = sadd.s32 1, %s24
      %s34 = scalar_select %p31, %s33, %s24
      %p35 = scmp.ge.s32.totalorder %s34, 2
      %s36 = scalar_select %p35, 0, %s34
      %s37 = ssub.s32 %s24, %s36
      %p38 = scmp.eq.s32.totalorder %s37, 0
      %s40 = sadd.s32 %s39, 1
      %s41 = scalar_select %p38, %s39, %s40
      %p44 = pneg %p38
      %p45 = scmp.eq.s32.totalorder %s17, 1
      %p46 = por %p44, %p45
      %p47 = scmp.ne.s32.totalorder %s39, %s42
      %p48 = scmp.eq.s32.totalorder %s17, 0
      %p49 = por %p47, %p48
      %p50 = scmp.ne.s32.totalorder %s39, %s42
      %p51 = scmp.eq.s32.totalorder %s22, 1
      %p52 = por %p50, %p51
      %p53 = scmp.ne.s32.totalorder %s42, %s43
      %p54 = scmp.eq.s32.totalorder %s22, 0
      %p55 = por %p53, %p54
      %p56 = scmp.ne.s32.totalorder %s42, %s43
      %p57 = scmp.eq.s32.totalorder %s23, 1
      %p58 = por %p56, %p57
      %p60 = scmp.ne.s32.totalorder %s43, %s59
      %p61 = scmp.eq.s32.totalorder %s23, 0
      %p62 = por %p60, %p61
      %s63 = ssub.s32 %s25, %s32
      %p64 = scmp.eq.s32.totalorder %s63, 0
      %s66 = sadd.s32 %s65, 1
      %s67 = scalar_select %p64, %s65, %s66
      %p70 = pneg %p64
      %p71 = scmp.eq.s32.totalorder %s17, 1
      %p72 = por %p70, %p71
      %p73 = scmp.ne.s32.totalorder %s65, %s68
      %p74 = scmp.eq.s32.totalorder %s17, 0
      %p75 = por %p73, %p74
      %p76 = scmp.ne.s32.totalorder %s65, %s68
      %p77 = scmp.eq.s32.totalorder %s22, 1
      %p78 = por %p76, %p77
      %p79 = scmp.ne.s32.totalorder %s68, %s69
      %p80 = scmp.eq.s32.totalorder %s22, 0
      %p81 = por %p79, %p80
      %p82 = scmp.ne.s32.totalorder %s68, %s69
      %p83 = scmp.eq.s32.totalorder %s23, 1
      %p84 = por %p82, %p83
      %p86 = scmp.ne.s32.totalorder %s69, %s85
      %p87 = scmp.eq.s32.totalorder %s23, 0
      %p88 = por %p86, %p87
      %s89 = ssub.s32 %s25, %s32
      %p90 = scmp.eq.s32.totalorder %s89, 0
      %s92 = sadd.s32 %s91, 1
      %s93 = scalar_select %p90, %s91, %s92
      %p96 = pneg %p90
      %p97 = scmp.eq.s32.totalorder %s17, 1
      %p98 = por %p96, %p97
      %p99 = scmp.ne.s32.totalorder %s91, %s94
      %p100 = scmp.eq.s32.totalorder %s17, 0
      %p101 = por %p99, %p100
      %p102 = scmp.ne.s32.totalorder %s91, %s94
      %p103 = scmp.eq.s32.totalorder %s22, 1
      %p104 = por %p102, %p103
      %p105 = scmp.ne.s32.totalorder %s94, %s95
      %p106 = scmp.eq.s32.totalorder %s22, 0
      %p107 = por %p105, %p106
      %p108 = scmp.ne.s32.totalorder %s94, %s95
      %p109 = scmp.eq.s32.totalorder %s23, 1
      %p110 = por %p108, %p109
      %p112 = scmp.ne.s32.totalorder %s95, %s111
      %p113 = scmp.eq.s32.totalorder %s23, 0
      %p114 = por %p112, %p113
      %s115 = ssub.s32 %s24, %s36
      %p116 = scmp.eq.s32.totalorder %s115, 0
      %s118 = sadd.s32 %s117, 1
      %s119 = scalar_select %p116, %s117, %s118
      %p122 = pneg %p116
      %p123 = scmp.eq.s32.totalorder %s17, 1
      %p124 = por %p122, %p123
      %p125 = scmp.ne.s32.totalorder %s117, %s120
      %p126 = scmp.eq.s32.totalorder %s17, 0
      %p127 = por %p125, %p126
      %p128 = scmp.ne.s32.totalorder %s117, %s120
      %p129 = scmp.eq.s32.totalorder %s22, 1
      %p130 = por %p128, %p129
      %p131 = scmp.ne.s32.totalorder %s120, %s121
      %p132 = scmp.eq.s32.totalorder %s22, 0
      %p133 = por %p131, %p132
      %p134 = scmp.ne.s32.totalorder %s120, %s121
      %p135 = scmp.eq.s32.totalorder %s23, 1
      %p136 = por %p134, %p135
      %p138 = scmp.ne.s32.totalorder %s121, %s137
      %p139 = scmp.eq.s32.totalorder %s23, 0
      %p140 = por %p138, %p139
      %s141 = ssub.s32 %s24, %s36
      %s142 = ssub.s32 %s25, %s32
      %s143 = sor.u32 %s141, %s142
      %p144 = scmp.eq.s32.totalorder %s143, 0
      %s146 = sadd.s32 %s145, 1
      %s147 = scalar_select %p144, %s145, %s146
      %p150 = pneg %p144
      %p151 = scmp.eq.s32.totalorder %s17, 1
      %p152 = por %p150, %p151
      %p153 = scmp.ne.s32.totalorder %s145, %s148
      %p154 = scmp.eq.s32.totalorder %s17, 0
      %p155 = por %p153, %p154
      %p156 = scmp.ne.s32.totalorder %s145, %s148
      %p157 = scmp.eq.s32.totalorder %s22, 1
      %p158 = por %p156, %p157
      %p159 = scmp.ne.s32.totalorder %s148, %s149
      %p160 = scmp.eq.s32.totalorder %s22, 0
      %p161 = por %p159, %p160
      %p162 = scmp.ne.s32.totalorder %s148, %s149
      %p163 = scmp.eq.s32.totalorder %s23, 1
      %p164 = por %p162, %p163
      %p166 = scmp.ne.s32.totalorder %s149, %s165
      %p167 = scmp.eq.s32.totalorder %s23, 0
      %p168 = por %p166, %p167
      %p169 = scmp.le.s32.totalorder 1, %s17
      %p170 = scmp.lt.s32.totalorder %s17, 3
      %p171 = pnand %p169, %p170
      %p172 = pneg %p171
      // Predicated region
      $region9: #{tpu_custom_call.1} parent=5 // pred_check
        _
      $region10: #{tpu_custom_call.1} parent=5 // pred_check_branch
        %174 = sbr.rel (%p171) target = $region12
      $region11: #{tpu_custom_call.1} parent=5 // pred_region
        %s175 = ssub.s32 %s17, 1
        // Predicated region
        $region13: #{tpu_custom_call.1} parent=11 // pred_check
          %p176 = pneg %p81
        $region14: #{tpu_custom_call.1} parent=11 // pred_check_branch
          %178 = sbr.rel (%p176) target = $region16
        $region15: #{tpu_custom_call.1} parent=11 // pred_region
          %s180 = ssub.s32 256, 256
          %181 = vsyncadd [#allocation6], %s180
          %s182 = smul.addr %s27, 4
          %s183 = smul.addr %s182, 64
          %s184 = scalar_lea.hbm %s1, %s183
          %s185 = sshll.u32 [#allocation5], 4
          %s186 = int_to_ptr.vmem [resolvable:$true] %s185
          %191 = dma.hbm_to_vmem [thread:$0]  %s184, 256, %s186, [#allocation6], 64, 64, 4
        $region16: #{tpu_custom_call.1} parent=11 // pred_fallthru
          _
        // Predicated region
        $region17: #{tpu_custom_call.1} parent=11 // pred_check
          %p192 = pneg %p107
        $region18: #{tpu_custom_call.1} parent=11 // pred_check_branch
          %194 = sbr.rel (%p192) target = $region20
        $region19: #{tpu_custom_call.1} parent=11 // pred_region
          %p195 = scmp.lt.s32.totalorder %s27, 0
          %s196 = scalar_select %p195, %s27, 0
          %s197 = scalar_lea.vmem %s2, %s196
        $region20: #{tpu_custom_call.1} parent=11 // pred_fallthru
          _
      $region12: #{tpu_custom_call.1} parent=5 // pred_fallthru
        _
      %p198 = scmp.lt.s32.totalorder %s17, 2
      // Predicated region
      $region21: #{tpu_custom_call.1} parent=5 // pred_check
        %p199 = pneg %p198
      $region22: #{tpu_custom_call.1} parent=5 // pred_check_branch
        %201 = sbr.rel (%p199) target = $region24
      $region23: #{tpu_custom_call.1} parent=5 // pred_region
        // Predicated region
        $region25: #{tpu_custom_call.1} parent=23 // pred_check
          %p202 = pneg %p49
        $region26: #{tpu_custom_call.1} parent=23 // pred_check_branch
          %204 = sbr.rel (%p202) target = $region28
        $region27: #{tpu_custom_call.1} parent=23 // pred_region
          %s205 = sand.u32 %s39, 1
          %s206 = scalar_lea.sflag [#allocation3], %s205
          %s207 = sand.u32 %s39, 1
          %s208 = smul.addr %s207, 4
          %s209 = scalar_lea.vmem [#allocation2], %s208
          %s211 = ssub.s32 64, 64
          %212 = vsyncadd %s206, %s211
          %s213 = smul.addr %s24, 64
          %s214 = scalar_lea.hbm %s0, %s213
          %s216 = sshll.u32 %s209, 4
          %s217 = int_to_ptr.vmem [resolvable:$true] %s216
          %219 = dma.hbm_to_vmem [thread:$0]  %s214, 64, %s217, %s206
        $region28: #{tpu_custom_call.1} parent=23 // pred_fallthru
          _
        // Predicated region
        $region29: #{tpu_custom_call.1} parent=23 // pred_check
          %p220 = pneg %p127
        $region30: #{tpu_custom_call.1} parent=23 // pred_check_branch
          %222 = sbr.rel (%p220) target = $region32
        $region31: #{tpu_custom_call.1} parent=23 // pred_region
          %p223 = scmp.lt.s32.totalorder %s24, 1
          %s224 = scalar_select %p223, %s24, 1
          %s225 = scalar_lea.vmem %s3, %s224
        $region32: #{tpu_custom_call.1} parent=23 // pred_fallthru
          _
      $region24: #{tpu_custom_call.1} parent=5 // pred_fallthru
        _
      %p226 = scmp.le.s32.totalorder 1, %s17
      %p227 = scmp.lt.s32.totalorder %s17, 3
      %p228 = pnand %p226, %p227
      %p229 = pneg %p228
      // Predicated region
      $region33: #{tpu_custom_call.1} parent=5 // pred_check
        _
      $region34: #{tpu_custom_call.1} parent=5 // pred_check_branch
        %231 = sbr.rel (%p228) target = $region36
      $region35: #{tpu_custom_call.1} parent=5 // pred_region
        %s232 = ssub.s32 %s17, 1
        %s233 = sand.u32 %s42, 1
        %s234 = scalar_lea.sflag [#allocation3], %s233
        %s235 = sand.u32 %s42, 1
        %s236 = smul.addr %s235, 4
        %s237 = scalar_lea.vmem [#allocation2], %s236
        // Predicated region
        $region37: #{tpu_custom_call.1} parent=35 // pred_check
          %p238 = pneg %p55
        $region38: #{tpu_custom_call.1} parent=35 // pred_check_branch
          %240 = sbr.rel (%p238) target = $region40
        $region39: #{tpu_custom_call.1} parent=35 // pred_region
          %241 = dma.done %s234, 64
        $region40: #{tpu_custom_call.1} parent=35 // pred_fallthru
          _
        // Predicated region
        $region41: #{tpu_custom_call.1} parent=35 // pred_check
          %p242 = pneg %p81
        $region42: #{tpu_custom_call.1} parent=35 // pred_check_branch
          %244 = sbr.rel (%p242) target = $region44
        $region43: #{tpu_custom_call.1} parent=35 // pred_region
          %245 = dma.done [#allocation6], 256
        $region44: #{tpu_custom_call.1} parent=35 // pred_fallthru
          _
        %s246 = sand.u32 %s42, 1
        %s247 = scalar_lea.sflag [#allocation3], %s246
        %s248 = sand.u32 %s42, 1
        %s249 = smul.addr %s248, 4
        %s250 = scalar_lea.vmem [#allocation2], %s249
        %p251 = pneg %p55
        %p252 = pneg %p52
        %p253 = pneg %p81
        %p254 = pneg %p78
        %p255 = scmp.lt.s32.totalorder %s27, 0
        %s256 = scalar_select %p255, %s27, 0
        %s257 = scalar_lea.vmem %s2, %s256
        %p258 = pneg %p107
        %p259 = pneg %p104
        %p260 = scmp.lt.s32.totalorder %s26, 1
        %s261 = scalar_select %p260, %s26, 1
        %s262 = scalar_lea.vmem %s3, %s261
        %p263 = pneg %p133
        %p264 = pneg %p130
        %p265 = pneg %p161
        %p266 = pneg %p158
        %s267 = sand.u32 %s148, 1
        %s268 = scalar_lea.sflag [#allocation4], %s267
        %s269 = sand.u32 %s148, 1
        %s270 = smul.addr %s269, 8
        %s271 = scalar_lea.vmem [#allocation7], %s270
        %p272 = scmp.lt.s32.totalorder %s27, 0
        %s273 = scalar_select %p272, %s27, 0
        %s274 = scalar_lea.vmem %s2, %s273
        %p275 = scmp.lt.s32.totalorder %s26, 1
        %s276 = scalar_select %p275, %s26, 1
        %s277 = scalar_lea.vmem %s3, %s276
        %v279 = vld [vmem:[%s237] sm:$0xf]
        %v280 = vld [vmem:[#allocation5] sm:$0xf]
        %v281 = vld [vmem:[#allocation5 + $0x4] sm:$0xf]
        %v282 = vld [vmem:[#allocation5 + $0x8] sm:$0xf]
        %v283 = vld [vmem:[#allocation5 + $0xc] sm:$0xf]
        %v284 = vld [vmem:[%s274] sm:$0x1]
        %v286 = vlaneseq
        %v287 = vshrl.u32 %v286, 7
        %v288 = vsub.s32 0, %v287
        %v289 = vrot.slane %v284, %v288
        %v295 = vunpack.c.l.b16 %v280
        %v296 = vunpack.c.l.b16 %v281
        %v297 = vunpack.c.l.b16 %v282
        %v298 = vunpack.c.l.b16 %v283
        %v299 = vpack.c.b16 %v296, %v295
        %v300 = vpack.c.b16 %v298, %v297
        %vm303 = vcmask 261120
        %v305 = vsel %vm303, %v279, 0
        %307 = vmatprep.subr.bf16.mxu0 0
        %308 = vmatpush1.bf16.msra.mxu0 %v299
        %309 = vmatprep.subr.bf16.mxu0 0
        %310 = vmatpush1.bf16.msra.mxu0 %v300
        %311 = vmatprep.subr.bf16.mxu0 0
        %312 = vmatpush1.bf16.msra.mxu0 0
        %313 = vmatprep.subr.bf16.mxu0 0
        %314 = vmatpush1.bf16.msra.mxu0 0
        %315 = vmatprep.subr.bf16.mxu0 0
        %316 = vmatpush1.bf16.msra.mxu0 0
        %317 = vmatprep.subr.bf16.mxu0 0
        %318 = vmatpush1.bf16.msra.mxu0 0
        %319 = vmatprep.subr.bf16.mxu0 0
        %320 = vmatpush1.bf16.msra.mxu0 0
        %321 = vmatprep.subr.bf16.mxu0 0
        %322 = vmatpush1.bf16.msra.mxu0 0
        %323 = vmatprep.subr.bf16.mxu0 0
        %324 = vmatpush1.bf16.msra.mxu0 0
        %325 = vmatprep.subr.bf16.mxu0 0
        %326 = vmatpush1.bf16.msra.mxu0 0
        %327 = vmatprep.subr.bf16.mxu0 0
        %328 = vmatpush1.bf16.msra.mxu0 0
        %329 = vmatprep.subr.bf16.mxu0 0
        %330 = vmatpush1.bf16.msra.mxu0 0
        %331 = vmatprep.subr.bf16.mxu0 0
        %332 = vmatpush1.bf16.msra.mxu0 0
        %333 = vmatprep.subr.bf16.mxu0 0
        %334 = vmatpush1.bf16.msra.mxu0 0
        %335 = vmatprep.subr.bf16.mxu0 0
        %336 = vmatpush1.bf16.msra.mxu0 0
        %337 = vmatprep.subr.bf16.mxu0 0
        %338 = vmatpush1.bf16.msra.mxu0 0
        %339 = vmatprep.mubr.bf16.mxu0 0
        %340 = vmatmul.mubr.bf16.gmra.mrb[0].mxu0 %v305
        %v341 = vpop.f32.mrb[0].mxu0
        %v342 = vadd.f32 %v289, %v341
        %v343 = vpop.f32.mrb[0].mxu0
        %v344 = vpop.f32.mrb[0].mxu0
        %v345 = vpop.f32.mrb[0].mxu0
        %346 = vdwg.mxu0
        %v347 = vpack.c.bf16 %v342, %v342
        %v348 = vld [vmem:[%s277] sm:$0x1]
        %v350 = vlaneseq
        %v351 = vshrl.u32 %v350, 7
        %v352 = vsub.s32 0, %v351
        %v353 = vrot.slane %v348, %v352
        %356 = vrot.lane.b32.xlu0 %v347, 96
        %v357 = vpop.permute.xlu0 %356
        %vm358 = vcmask 64512
        %v360 = vsel %vm358, %v347, 0
        %v363 = vsel %vm358, %v357, 0
        %365 = vmatprep.subr.bf16.mxu0 0
        %366 = vmatpush1.bf16.xpose.msra.mxu0 %v363
        %367 = vmatprep.subr.bf16.mxu0 0
        %368 = vmatpush1.bf16.xpose.msra.mxu0 0
        %369 = vmatprep.subr.bf16.mxu0 0
        %370 = vmatpush1.bf16.xpose.msra.mxu0 0
        %371 = vmatprep.subr.bf16.mxu0 0
        %372 = vmatpush1.bf16.xpose.msra.mxu0 0
        %373 = vmatprep.subr.bf16.mxu0 0
        %374 = vmatpush1.bf16.xpose.msra.mxu0 0
        %375 = vmatprep.subr.bf16.mxu0 0
        %376 = vmatpush1.bf16.xpose.msra.mxu0 0
        %377 = vmatprep.subr.bf16.mxu0 0
        %378 = vmatpush1.bf16.xpose.msra.mxu0 0
        %379 = vmatprep.subr.bf16.mxu0 0
        %380 = vmatpush1.bf16.xpose.msra.mxu0 0
        %381 = vmatprep.subr.bf16.mxu0 0
        %382 = vmatpush1.bf16.xpose.msra.mxu0 0
        %383 = vmatprep.subr.bf16.mxu0 0
        %384 = vmatpush1.bf16.xpose.msra.mxu0 0
        %385 = vmatprep.subr.bf16.mxu0 0
        %386 = vmatpush1.bf16.xpose.msra.mxu0 0
        %387 = vmatprep.subr.bf16.mxu0 0
        %388 = vmatpush1.bf16.xpose.msra.mxu0 0
        %389 = vmatprep.subr.bf16.mxu0 0
        %390 = vmatpush1.bf16.xpose.msra.mxu0 0
        %391 = vmatprep.subr.bf16.mxu0 0
        %392 = vmatpush1.bf16.xpose.msra.mxu0 0
        %393 = vmatprep.subr.bf16.mxu0 0
        %394 = vmatpush1.bf16.xpose.msra.mxu0 0
        %395 = vmatprep.subr.bf16.mxu0 0
        %396 = vmatpush1.bf16.xpose.msra.mxu0 0
        %397 = vmatprep.mubr.bf16.mxu0 0
        %398 = vmatmul.mubr.bf16.gmra.mrb[0].mxu0 %v360
        %v399 = vpop.f32.mrb[0].mxu0
        %v400 = vadd.f32 %v353, %v399
        %v401 = vpop.f32.mrb[0].mxu0
        %v402 = vpop.f32.mrb[0].mxu0
        %v403 = vpop.f32.mrb[0].mxu0
        %404 = vdwg.mxu0
        %v405 = vsel %vm358, %v400, -inf
        %406 = vmax.xlane.f32.xlu0 %v405
        %v407 = vpop.xlane.xlu0 %406
        %v408 = vsub.f32 %v400, %v407
        %v409 = vmul.f32 %v408, 1.442695
        %v410 = vpow.pop %v409
        %v411 = vsel %vm358, %v410, 0.0
        %412 = vadd.xlane.f32.xlu0 %v411
        %v413 = vpop.xlane.xlu0 %412
        %v414 = vpack.c.bf16 %v410, %v410
        %415 = vrot.lane.b32.xlu0 %v347, 64
        %v416 = vpop.permute.xlu0 %415
        %v418 = vsel %vm358, %v414, 0
        %vm420 = vcmask 1043456
        %v422 = vsel %vm420, %v416, 0
        %424 = vmatprep.subr.bf16.mxu0 0
        %425 = vmatpush1.bf16.msra.mxu0 %v422
        %426 = vmatprep.subr.bf16.mxu0 0
        %427 = vmatpush1.bf16.msra.mxu0 0
        %428 = vmatprep.subr.bf16.mxu0 0
        %429 = vmatpush1.bf16.msra.mxu0 0
        %430 = vmatprep.subr.bf16.mxu0 0
        %431 = vmatpush1.bf16.msra.mxu0 0
        %432 = vmatprep.subr.bf16.mxu0 0
        %433 = vmatpush1.bf16.msra.mxu0 0
        %434 = vmatprep.subr.bf16.mxu0 0
        %435 = vmatpush1.bf16.msra.mxu0 0
        %436 = vmatprep.subr.bf16.mxu0 0
        %437 = vmatpush1.bf16.msra.mxu0 0
        %438 = vmatprep.subr.bf16.mxu0 0
        %439 = vmatpush1.bf16.msra.mxu0 0
        %440 = vmatprep.subr.bf16.mxu0 0
        %441 = vmatpush1.bf16.msra.mxu0 0
        %442 = vmatprep.subr.bf16.mxu0 0
        %443 = vmatpush1.bf16.msra.mxu0 0
        %444 = vmatprep.subr.bf16.mxu0 0
        %445 = vmatpush1.bf16.msra.mxu0 0
        %446 = vmatprep.subr.bf16.mxu0 0
        %447 = vmatpush1.bf16.msra.mxu0 0
        %448 = vmatprep.subr.bf16.mxu0 0
        %449 = vmatpush1.bf16.msra.mxu0 0
        %450 = vmatprep.subr.bf16.mxu0 0
        %451 = vmatpush1.bf16.msra.mxu0 0
        %452 = vmatprep.subr.bf16.mxu0 0
        %453 = vmatpush1.bf16.msra.mxu0 0
        %454 = vmatprep.subr.bf16.mxu0 0
        %455 = vmatpush1.bf16.msra.mxu0 0
        %456 = vmatprep.mubr.bf16.mxu0 0
        %457 = vmatmul.mubr.bf16.gmra.mrb[0].mxu0 %v418
        %v458 = vpop.f32.mrb[0].mxu0
        %v459 = vadd.f32 0.0, %v458
        %v460 = vpop.f32.mrb[0].mxu0
        %v461 = vpop.f32.mrb[0].mxu0
        %v462 = vpop.f32.mrb[0].mxu0
        %463 = vdwg.mxu0
        %v464 = vrcp.pop %v413
        %v465 = vmul.f32 %v459, %v464
        %466 = vrot.lane.b32.xlu0 %v347, 120
        %v467 = vpop.permute.xlu0 %466
        %468 = vrot.lane.b32.xlu0 %v347, 88
        %v469 = vpop.permute.xlu0 %468
        %v471 = vsel %vm358, %v467, 0
        %v474 = vsel %vm358, %v469, 0
        %476 = vmatprep.subr.bf16.mxu0 0
        %477 = vmatpush1.bf16.xpose.msra.mxu0 %v474
        %478 = vmatprep.subr.bf16.mxu0 0
        %479 = vmatpush1.bf16.xpose.msra.mxu0 0
        %480 = vmatprep.subr.bf16.mxu0 0
        %481 = vmatpush1.bf16.xpose.msra.mxu0 0
        %482 = vmatprep.subr.bf16.mxu0 0
        %483 = vmatpush1.bf16.xpose.msra.mxu0 0
        %484 = vmatprep.subr.bf16.mxu0 0
        %485 = vmatpush1.bf16.xpose.msra.mxu0 0
        %486 = vmatprep.subr.bf16.mxu0 0
        %487 = vmatpush1.bf16.xpose.msra.mxu0 0
        %488 = vmatprep.subr.bf16.mxu0 0
        %489 = vmatpush1.bf16.xpose.msra.mxu0 0
        %490 = vmatprep.subr.bf16.mxu0 0
        %491 = vmatpush1.bf16.xpose.msra.mxu0 0
        %492 = vmatprep.subr.bf16.mxu0 0
        %493 = vmatpush1.bf16.xpose.msra.mxu0 0
        %494 = vmatprep.subr.bf16.mxu0 0
        %495 = vmatpush1.bf16.xpose.msra.mxu0 0
        %496 = vmatprep.subr.bf16.mxu0 0
        %497 = vmatpush1.bf16.xpose.msra.mxu0 0
        %498 = vmatprep.subr.bf16.mxu0 0
        %499 = vmatpush1.bf16.xpose.msra.mxu0 0
        %500 = vmatprep.subr.bf16.mxu0 0
        %501 = vmatpush1.bf16.xpose.msra.mxu0 0
        %502 = vmatprep.subr.bf16.mxu0 0
        %503 = vmatpush1.bf16.xpose.msra.mxu0 0
        %504 = vmatprep.subr.bf16.mxu0 0
        %505 = vmatpush1.bf16.xpose.msra.mxu0 0
        %506 = vmatprep.subr.bf16.mxu0 0
        %507 = vmatpush1.bf16.xpose.msra.mxu0 0
        %508 = vmatprep.mubr.bf16.mxu0 0
        %509 = vmatmul.mubr.bf16.gmra.mrb[0].mxu0 %v471
        %v510 = vpop.f32.mrb[0].mxu0
        %v511 = vadd.f32 %v353, %v510
        %v512 = vpop.f32.mrb[0].mxu0
        %v513 = vpop.f32.mrb[0].mxu0
        %v514 = vpop.f32.mrb[0].mxu0
        %515 = vdwg.mxu0
        %v516 = vsel %vm358, %v511, -inf
        %517 = vmax.xlane.f32.xlu0 %v516
        %v518 = vpop.xlane.xlu0 %517
        %v519 = vsub.f32 %v511, %v518
        %v520 = vmul.f32 %v519, 1.442695
        %v521 = vpow.pop %v520
        %v522 = vsel %vm358, %v521, 0.0
        %523 = vadd.xlane.f32.xlu0 %v522
        %v524 = vpop.xlane.xlu0 %523
        %v525 = vpack.c.bf16 %v521, %v521
        %526 = vrot.lane.b32.xlu0 %v347, 56
        %v527 = vpop.permute.xlu0 %526
        %v529 = vsel %vm358, %v525, 0
        %v532 = vsel %vm420, %v527, 0
        %534 = vmatprep.subr.bf16.mxu0 0
        %535 = vmatpush1.bf16.msra.mxu0 %v532
        %536 = vmatprep.subr.bf16.mxu0 0
        %537 = vmatpush1.bf16.msra.mxu0 0
        %538 = vmatprep.subr.bf16.mxu0 0
        %539 = vmatpush1.bf16.msra.mxu0 0
        %540 = vmatprep.subr.bf16.mxu0 0
        %541 = vmatpush1.bf16.msra.mxu0 0
        %542 = vmatprep.subr.bf16.mxu0 0
        %543 = vmatpush1.bf16.msra.mxu0 0
        %544 = vmatprep.subr.bf16.mxu0 0
        %545 = vmatpush1.bf16.msra.mxu0 0
        %546 = vmatprep.subr.bf16.mxu0 0
        %547 = vmatpush1.bf16.msra.mxu0 0
        %548 = vmatprep.subr.bf16.mxu0 0
        %549 = vmatpush1.bf16.msra.mxu0 0
        %550 = vmatprep.subr.bf16.mxu0 0
        %551 = vmatpush1.bf16.msra.mxu0 0
        %552 = vmatprep.subr.bf16.mxu0 0
        %553 = vmatpush1.bf16.msra.mxu0 0
        %554 = vmatprep.subr.bf16.mxu0 0
        %555 = vmatpush1.bf16.msra.mxu0 0
        %556 = vmatprep.subr.bf16.mxu0 0
        %557 = vmatpush1.bf16.msra.mxu0 0
        %558 = vmatprep.subr.bf16.mxu0 0
        %559 = vmatpush1.bf16.msra.mxu0 0
        %560 = vmatprep.subr.bf16.mxu0 0
        %561 = vmatpush1.bf16.msra.mxu0 0
        %562 = vmatprep.subr.bf16.mxu0 0
        %563 = vmatpush1.bf16.msra.mxu0 0
        %564 = vmatprep.subr.bf16.mxu0 0
        %565 = vmatpush1.bf16.msra.mxu0 0
        %566 = vmatprep.mubr.bf16.mxu0 0
        %567 = vmatmul.mubr.bf16.gmra.mrb[0].mxu0 %v529
        %v568 = vpop.f32.mrb[0].mxu0
        %v569 = vadd.f32 0.0, %v568
        %v570 = vpop.f32.mrb[0].mxu0
        %v571 = vpop.f32.mrb[0].mxu0
        %v572 = vpop.f32.mrb[0].mxu0
        %573 = vdwg.mxu0
        %v574 = vrcp.pop %v524
        %v575 = vmul.f32 %v569, %v574
        %576 = vrot.lane.b32.xlu0 %v347, 112
        %v577 = vpop.permute.xlu0 %576
        %578 = vrot.lane.b32.xlu0 %v347, 80
        %v579 = vpop.permute.xlu0 %578
        %v581 = vsel %vm358, %v577, 0
        %v584 = vsel %vm358, %v579, 0
        %586 = vmatprep.subr.bf16.mxu0 0
        %587 = vmatpush1.bf16.xpose.msra.mxu0 %v584
        %588 = vmatprep.subr.bf16.mxu0 0
        %589 = vmatpush1.bf16.xpose.msra.mxu0 0
        %590 = vmatprep.subr.bf16.mxu0 0
        %591 = vmatpush1.bf16.xpose.msra.mxu0 0
        %592 = vmatprep.subr.bf16.mxu0 0
        %593 = vmatpush1.bf16.xpose.msra.mxu0 0
        %594 = vmatprep.subr.bf16.mxu0 0
        %595 = vmatpush1.bf16.xpose.msra.mxu0 0
        %596 = vmatprep.subr.bf16.mxu0 0
        %597 = vmatpush1.bf16.xpose.msra.mxu0 0
        %598 = vmatprep.subr.bf16.mxu0 0
        %599 = vmatpush1.bf16.xpose.msra.mxu0 0
        %600 = vmatprep.subr.bf16.mxu0 0
        %601 = vmatpush1.bf16.xpose.msra.mxu0 0
        %602 = vmatprep.subr.bf16.mxu0 0
        %603 = vmatpush1.bf16.xpose.msra.mxu0 0
        %604 = vmatprep.subr.bf16.mxu0 0
        %605 = vmatpush1.bf16.xpose.msra.mxu0 0
        %606 = vmatprep.subr.bf16.mxu0 0
        %607 = vmatpush1.bf16.xpose.msra.mxu0 0
        %608 = vmatprep.subr.bf16.mxu0 0
        %609 = vmatpush1.bf16.xpose.msra.mxu0 0
        %610 = vmatprep.subr.bf16.mxu0 0
        %611 = vmatpush1.bf16.xpose.msra.mxu0 0
        %612 = vmatprep.subr.bf16.mxu0 0
        %613 = vmatpush1.bf16.xpose.msra.mxu0 0
        %614 = vmatprep.subr.bf16.mxu0 0
        %615 = vmatpush1.bf16.xpose.msra.mxu0 0
        %616 = vmatprep.subr.bf16.mxu0 0
        %617 = vmatpush1.bf16.xpose.msra.mxu0 0
        %618 = vmatprep.mubr.bf16.mxu0 0
        %619 = vmatmul.mubr.bf16.gmra.mrb[0].mxu0 %v581
        %v620 = vpop.f32.mrb[0].mxu0
        %v621 = vadd.f32 %v353, %v620
        %v622 = vpop.f32.mrb[0].mxu0
        %v623 = vpop.f32.mrb[0].mxu0
        %v624 = vpop.f32.mrb[0].mxu0
        %625 = vdwg.mxu0
        %v626 = vsel %vm358, %v621, -inf
        %627 = vmax.xlane.f32.xlu0 %v626
        %v628 = vpop.xlane.xlu0 %627
        %v629 = vsub.f32 %v621, %v628
        %v630 = vmul.f32 %v629, 1.442695
        %v631 = vpow.pop %v630
        %v632 = vsel %vm358, %v631, 0.0
        %633 = vadd.xlane.f32.xlu0 %v632
        %v634 = vpop.xlane.xlu0 %633
        %v635 = vpack.c.bf16 %v631, %v631
        %636 = vrot.lane.b32.xlu0 %v347, 48
        %v637 = vpop.permute.xlu0 %636
        %v639 = vsel %vm358, %v635, 0
        %v642 = vsel %vm420, %v637, 0
        %644 = vmatprep.subr.bf16.mxu0 0
        %645 = vmatpush1.bf16.msra.mxu0 %v642
        %646 = vmatprep.subr.bf16.mxu0 0
        %647 = vmatpush1.bf16.msra.mxu0 0
        %648 = vmatprep.subr.bf16.mxu0 0
        %649 = vmatpush1.bf16.msra.mxu0 0
        %650 = vmatprep.subr.bf16.mxu0 0
        %651 = vmatpush1.bf16.msra.mxu0 0
        %652 = vmatprep.subr.bf16.mxu0 0
        %653 = vmatpush1.bf16.msra.mxu0 0
        %654 = vmatprep.subr.bf16.mxu0 0
        %655 = vmatpush1.bf16.msra.mxu0 0
        %656 = vmatprep.subr.bf16.mxu0 0
        %657 = vmatpush1.bf16.msra.mxu0 0
        %658 = vmatprep.subr.bf16.mxu0 0
        %659 = vmatpush1.bf16.msra.mxu0 0
        %660 = vmatprep.subr.bf16.mxu0 0
        %661 = vmatpush1.bf16.msra.mxu0 0
        %662 = vmatprep.subr.bf16.mxu0 0
        %663 = vmatpush1.bf16.msra.mxu0 0
        %664 = vmatprep.subr.bf16.mxu0 0
        %665 = vmatpush1.bf16.msra.mxu0 0
        %666 = vmatprep.subr.bf16.mxu0 0
        %667 = vmatpush1.bf16.msra.mxu0 0
        %668 = vmatprep.subr.bf16.mxu0 0
        %669 = vmatpush1.bf16.msra.mxu0 0
        %670 = vmatprep.subr.bf16.mxu0 0
        %671 = vmatpush1.bf16.msra.mxu0 0
        %672 = vmatprep.subr.bf16.mxu0 0
        %673 = vmatpush1.bf16.msra.mxu0 0
        %674 = vmatprep.subr.bf16.mxu0 0
        %675 = vmatpush1.bf16.msra.mxu0 0
        %676 = vmatprep.mubr.bf16.mxu0 0
        %677 = vmatmul.mubr.bf16.gmra.mrb[0].mxu0 %v639
        %v678 = vpop.f32.mrb[0].mxu0
        %v679 = vadd.f32 0.0, %v678
        %v680 = vpop.f32.mrb[0].mxu0
        %v681 = vpop.f32.mrb[0].mxu0
        %v682 = vpop.f32.mrb[0].mxu0
        %683 = vdwg.mxu0
        %v684 = vrcp.pop %v634
        %v685 = vmul.f32 %v679, %v684
        %686 = vrot.lane.b32.xlu0 %v347, 104
        %v687 = vpop.permute.xlu0 %686
        %688 = vrot.lane.b32.xlu0 %v347, 72
        %v689 = vpop.permute.xlu0 %688
        %v691 = vsel %vm358, %v687, 0
        %v694 = vsel %vm358, %v689, 0
        %696 = vmatprep.subr.bf16.mxu0 0
        %697 = vmatpush1.bf16.xpose.msra.mxu0 %v694
        %698 = vmatprep.subr.bf16.mxu0 0
        %699 = vmatpush1.bf16.xpose.msra.mxu0 0
        %700 = vmatprep.subr.bf16.mxu0 0
        %701 = vmatpush1.bf16.xpose.msra.mxu0 0
        %702 = vmatprep.subr.bf16.mxu0 0
        %703 = vmatpush1.bf16.xpose.msra.mxu0 0
        %704 = vmatprep.subr.bf16.mxu0 0
        %705 = vmatpush1.bf16.xpose.msra.mxu0 0
        %706 = vmatprep.subr.bf16.mxu0 0
        %707 = vmatpush1.bf16.xpose.msra.mxu0 0
        %708 = vmatprep.subr.bf16.mxu0 0
        %709 = vmatpush1.bf16.xpose.msra.mxu0 0
        %710 = vmatprep.subr.bf16.mxu0 0
        %711 = vmatpush1.bf16.xpose.msra.mxu0 0
        %712 = vmatprep.subr.bf16.mxu0 0
        %713 = vmatpush1.bf16.xpose.msra.mxu0 0
        %714 = vmatprep.subr.bf16.mxu0 0
        %715 = vmatpush1.bf16.xpose.msra.mxu0 0
        %716 = vmatprep.subr.bf16.mxu0 0
        %717 = vmatpush1.bf16.xpose.msra.mxu0 0
        %718 = vmatprep.subr.bf16.mxu0 0
        %719 = vmatpush1.bf16.xpose.msra.mxu0 0
        %720 = vmatprep.subr.bf16.mxu0 0
        %721 = vmatpush1.bf16.xpose.msra.mxu0 0
        %722 = vmatprep.subr.bf16.mxu0 0
        %723 = vmatpush1.bf16.xpose.msra.mxu0 0
        %724 = vmatprep.subr.bf16.mxu0 0
        %725 = vmatpush1.bf16.xpose.msra.mxu0 0
        %726 = vmatprep.subr.bf16.mxu0 0
        %727 = vmatpush1.bf16.xpose.msra.mxu0 0
        %728 = vmatprep.mubr.bf16.mxu0 0
        %729 = vmatmul.mubr.bf16.gmra.mrb[0].mxu0 %v691
        %v730 = vpop.f32.mrb[0].mxu0
        %v731 = vadd.f32 %v353, %v730
        %v732 = vpop.f32.mrb[0].mxu0
        %v733 = vpop.f32.mrb[0].mxu0
        %v734 = vpop.f32.mrb[0].mxu0
        %735 = vdwg.mxu0
        %v736 = vsel %vm358, %v731, -inf
        %737 = vmax.xlane.f32.xlu0 %v736
        %v738 = vpop.xlane.xlu0 %737
        %v739 = vsub.f32 %v731, %v738
        %v740 = vmul.f32 %v739, 1.442695
        %v741 = vpow.pop %v740
        %v742 = vsel %vm358, %v741, 0.0
        %743 = vadd.xlane.f32.xlu0 %v742
        %v744 = vpop.xlane.xlu0 %743
        %v745 = vpack.c.bf16 %v741, %v741
        %746 = vrot.lane.b32.xlu0 %v347, 40
        %v747 = vpop.permute.xlu0 %746
        %v749 = vsel %vm358, %v745, 0
        %v752 = vsel %vm420, %v747, 0
        %754 = vmatprep.subr.bf16.mxu0 0
        %755 = vmatpush1.bf16.msra.mxu0 %v752
        %756 = vmatprep.subr.bf16.mxu0 0
        %757 = vmatpush1.bf16.msra.mxu0 0
        %758 = vmatprep.subr.bf16.mxu0 0
        %759 = vmatpush1.bf16.msra.mxu0 0
        %760 = vmatprep.subr.bf16.mxu0 0
        %761 = vmatpush1.bf16.msra.mxu0 0
        %762 = vmatprep.subr.bf16.mxu0 0
        %763 = vmatpush1.bf16.msra.mxu0 0
        %764 = vmatprep.subr.bf16.mxu0 0
        %765 = vmatpush1.bf16.msra.mxu0 0
        %766 = vmatprep.subr.bf16.mxu0 0
        %767 = vmatpush1.bf16.msra.mxu0 0
        %768 = vmatprep.subr.bf16.mxu0 0
        %769 = vmatpush1.bf16.msra.mxu0 0
        %770 = vmatprep.subr.bf16.mxu0 0
        %771 = vmatpush1.bf16.msra.mxu0 0
        %772 = vmatprep.subr.bf16.mxu0 0
        %773 = vmatpush1.bf16.msra.mxu0 0
        %774 = vmatprep.subr.bf16.mxu0 0
        %775 = vmatpush1.bf16.msra.mxu0 0
        %776 = vmatprep.subr.bf16.mxu0 0
        %777 = vmatpush1.bf16.msra.mxu0 0
        %778 = vmatprep.subr.bf16.mxu0 0
        %779 = vmatpush1.bf16.msra.mxu0 0
        %780 = vmatprep.subr.bf16.mxu0 0
        %781 = vmatpush1.bf16.msra.mxu0 0
        %782 = vmatprep.subr.bf16.mxu0 0
        %783 = vmatpush1.bf16.msra.mxu0 0
        %784 = vmatprep.subr.bf16.mxu0 0
        %785 = vmatpush1.bf16.msra.mxu0 0
        %786 = vmatprep.mubr.bf16.mxu0 0
        %787 = vmatmul.mubr.bf16.gmra.mrb[0].mxu0 %v749
        %v788 = vpop.f32.mrb[0].mxu0
        %v789 = vadd.f32 0.0, %v788
        %v790 = vpop.f32.mrb[0].mxu0
        %v791 = vpop.f32.mrb[0].mxu0
        %v792 = vpop.f32.mrb[0].mxu0
        %793 = vdwg.mxu0
        %v794 = vrcp.pop %v744
        %v795 = vmul.f32 %v789, %v794
        %797 = vrot.lane.b32.xlu0 %v575, 8
        %v798 = vpop.permute.xlu0 %797
        %801 = vrot.lane.b32.xlu0 %v685, 16
        %v802 = vpop.permute.xlu0 %801
        %805 = vrot.lane.b32.xlu0 %v795, 24
        %v806 = vpop.permute.xlu0 %805
        %v808 = vsel %vm358, %v465, %v798
        %vm809 = vcmask 130048
        %v810 = vsel %vm809, %v808, %v802
        %vm811 = vcmask 195584
        %v812 = vsel %vm811, %v810, %v806
        %813 = vst.msk [vmem:[%s271] sm:$0xff] %vm303, %v812
        %s814 = sand.u32 %s148, 1
        %s815 = scalar_lea.sflag [#allocation4], %s814
        %s816 = sand.u32 %s148, 1
        %s817 = smul.addr %s816, 8
        %s818 = scalar_lea.vmem [#allocation7], %s817
        // Predicated region
        $region45: #{tpu_custom_call.1} parent=35 // pred_check
          %p819 = pneg %p158
        $region46: #{tpu_custom_call.1} parent=35 // pred_check_branch
          %821 = sbr.rel (%p819) target = $region48
        $region47: #{tpu_custom_call.1} parent=35 // pred_region
          %s823 = ssub.s32 128, 128
          %824 = vsyncadd %s815, %s823
          %s825 = sadd.s32 %s27, %s26
          %s826 = smul.addr %s825, 128
          %s827 = scalar_lea.hbm %s4, %s826
          %s829 = sshll.u32 %s818, 4
          %s830 = int_to_ptr.vmem [resolvable:$true] %s829
          %832 = dma.vmem_to_hbm [thread:$0]  %s830, 128, %s827, %s815
        $region48: #{tpu_custom_call.1} parent=35 // pred_fallthru
          _
      $region36: #{tpu_custom_call.1} parent=5 // pred_fallthru
        _
      %p833 = scmp.le.s32.totalorder 2, %s17
      // Predicated region
      $region49: #{tpu_custom_call.1} parent=5 // pred_check
        %p834 = pneg %p833
      $region50: #{tpu_custom_call.1} parent=5 // pred_check_branch
        %836 = sbr.rel (%p834) target = $region52
      $region51: #{tpu_custom_call.1} parent=5 // pred_region
        %s837 = ssub.s32 %s17, 2
        // Predicated region
        $region53: #{tpu_custom_call.1} parent=51 // pred_check
          %p838 = pneg %p164
        $region54: #{tpu_custom_call.1} parent=51 // pred_check_branch
          %840 = sbr.rel (%p838) target = $region56
        $region55: #{tpu_custom_call.1} parent=51 // pred_region
          %s841 = sand.u32 %s149, 1
          %s842 = scalar_lea.sflag [#allocation4], %s841
          %s843 = sand.u32 %s149, 1
          %s844 = smul.addr %s843, 8
          %s845 = scalar_lea.vmem [#allocation7], %s844
          %846 = dma.done %s842, 128
        $region56: #{tpu_custom_call.1} parent=51 // pred_fallthru
          _
      $region52: #{tpu_custom_call.1} parent=5 // pred_fallthru
        _
    $region6: #{tpu_custom_call.1} parent=1 // loop_footer
      %s21 = sadd.s32 1, %s17
    $region7: #{tpu_custom_call.1} parent=1 // loop_footer_branch
      %16 = sbr.rel target = $region3
    $region8: #{tpu_custom_call.1} parent=1 // loop_exit
      _
    %847 = vsyncpa [#allocation3], 1
    %s848 = scalar_lea.sflag [#allocation3], 1
    %849 = vsyncpa %s848, 1
    %850 = vsyncpa [#allocation6], 1
    %851 = vsyncpa [#allocation4], 1
    %s852 = scalar_lea.sflag [#allocation4], 1
    %853 = vsyncpa %s852, 1

</llo_original>
